<compile_context>
chip_gen: v7x
topology: tpu7x:2x2x1
jax: 0.10.0
libtpu: 0.0.40
codegen_flags: <defaults>
</compile_context>

<pallas_src>
import math

import jax
import jax.numpy as jnp
from jax.experimental import pallas as pl
from jax.experimental.pallas import tpu as pltpu

EPS_BN = 1e-10


def _round_up(x, m):
    return ((x + m - 1) // m) * m


# ----------------------------------------------------------------------------- kernel
def fused_decoder_kernel(u_top_ref, z_c_ref, V_ref, p_ref, out_ref):
    """Whole decoder ladder (layers L..0) in one kernel, everything VMEM resident.

    Shapes (feature dims zero-padded to PAD, a multiple of 128):
      u_top_ref : (n_unlab, PAD)        unlabeled slice of y_c (top-layer input)
      z_c_ref   : (L+1, n_unlab, PAD)   corrupted encoder activations per layer
      V_ref     : (max(L,1), PAD, PAD)  decoder weights, V_ref[l] used at layer l
      p_ref     : (L+1, 12, PAD)        a1..a10, m, inv_v  per layer
      out_ref   : (L+1, n_unlab, PAD)   z_est_bn per layer (lane-dense slab)
    """
    n = u_top_ref.shape[0]
    L = z_c_ref.shape[0] - 1
    inv_nm1 = 1.0 / (n - 1)          # torch.var(0) default: unbiased (N-1)

    z_prev = None
    for l in range(L, -1, -1):       # statically unrolled (shapes are static)
        if l == L:
            u = u_top_ref[...]
        else:
            # u = z_est[l+1] @ V[l]; padded rows/cols of V are zero so padding
            # columns of z_prev contribute nothing.
            u = jnp.dot(z_prev, V_ref[l], preferred_element_type=jnp.float32)

        # batch_normalization over the batch axis (matches the PyTorch helper).
        mean = jnp.mean(u, axis=0, keepdims=True)
        diff = u - mean
        var = jnp.sum(diff * diff, axis=0, keepdims=True) * inv_nm1
        u_bn = diff * jax.lax.rsqrt(var + EPS_BN)        # rsqrt -> EUP slot

        p = p_ref[l]                                      # (12, PAD)
        a1, a2, a3, a4, a5 = p[0:1, :], p[1:2, :], p[2:3, :], p[3:4, :], p[4:5, :]
        a6, a7, a8, a9, a10 = p[5:6, :], p[6:7, :], p[7:8, :], p[8:9, :], p[9:10, :]
        m_row = p[10:11, :]
        inv_v_row = p[11:12, :]

        mu = a1 * jax.nn.sigmoid(a2 * u_bn + a3) + a4 * u_bn + a5
        vv = a6 * jax.nn.sigmoid(a7 * u_bn + a8) + a9 * u_bn + a10
        z_est = (z_c_ref[l] - mu) * vv + mu

        out_ref[l] = (z_est - m_row) * inv_v_row          # (z_est - m) / v
        z_prev = z_est


@jax.jit
def fused_decoder_call(u_top, z_c_stack, V_stack, p_stack):
    Lp1, n_unlab, PAD = z_c_stack.shape
    vmem = pl.BlockSpec(memory_space=pltpu.MemorySpace.VMEM)
    return pl.pallas_call(
        fused_decoder_kernel,
        out_shape=jax.ShapeDtypeStruct((Lp1, n_unlab, PAD), jnp.float32),
        in_specs=[vmem, vmem, vmem, vmem],
        out_specs=vmem,
    )(u_top, z_c_stack, V_stack, p_stack)


# ----------------------------------------------------------------------------- module
class Decoder:
    """JAX/Pallas port of the PyTorch ladder-network Decoder (fused forward)."""

    def __init__(self, layer_sizes, key):
        self.layer_sizes = list(layer_sizes)
        self.L = len(layer_sizes) - 1
        self.PAD = max(128, _round_up(max(layer_sizes), 128))
        shapes = list(zip(layer_sizes[:-1], layer_sizes[1:]))
        keys = jax.random.split(key, self.L + len(layer_sizes))

        # V[l] : (layer_sizes[l+1], layer_sizes[l]) / sqrt(layer_sizes[l+1])
        self.V = [
            (jax.random.normal(keys[i], (s[1], s[0]), jnp.float32) / math.sqrt(s[1]))
            for i, s in enumerate(shapes)
        ]

        # G_gauss params a1..a10 stacked as (10, size). PyTorch init (zeros/ones)
        # would make the output identically zero, so perturb slightly so the
        # kernel check is non-trivial.
        self.a = []
        for l, size in enumerate(layer_sizes):
            base = jnp.zeros((10, size), jnp.float32).at[1].set(1.0).at[6].set(1.0)
            noise = 0.1 * jax.random.normal(keys[self.L + l], (10, size), jnp.float32)
            self.a.append(base + noise)

        # Precompute the padded, stacked weight/param tensors ONCE (only the
        # m / 1/v rows change per call).
        PAD = self.PAD
        V_stack = jnp.zeros((max(self.L, 1), PAD, PAD), jnp.float32)
        for l, (s_in, s_out) in enumerate(shapes):        # V[l]: (s_out, s_in)
            V_stack = V_stack.at[l, :s_out, :s_in].set(self.V[l])
        self.V_stack = V_stack

        a_stack = jnp.zeros((self.L + 1, 10, PAD), jnp.float32)
        for l, size in enumerate(layer_sizes):
            a_stack = a_stack.at[l, :, :size].set(self.a[l])
        self.a_stack = a_stack

    def _row(self, val, size):
        row = jnp.broadcast_to(jnp.asarray(val, jnp.float32), (size,))
        return jnp.pad(row.astype(jnp.float32), (0, self.PAD - size))

    def __call__(self, y_c, clean, corr, batch_size):
        L, PAD = self.L, self.PAD

        # Per-call packing (cheap XLA glue, one pack per forward — not one
        # pallas_call + 6 DMA'd inputs per layer).
        m_rows, iv_rows, zc_pads = [], [], []
        for l in range(L + 1):
            size = self.layer_sizes[l]
            m = clean['unlabeled']['m'].get(l, 0)
            v = clean['unlabeled']['v'].get(l, 1 - 1e-10)
            m_rows.append(self._row(m, size))
            iv_rows.append(self._row(1.0 / jnp.asarray(v, jnp.float32), size))
            z_c = corr['unlabeled']['z'][l]
            zc_pads.append(jnp.pad(z_c.astype(jnp.float32),
                                   ((0, 0), (0, PAD - size))))
        m_stack = jnp.stack(m_rows)[:, None, :]          # (L+1, 1, PAD)
        iv_stack = jnp.stack(iv_rows)[:, None, :]        # (L+1, 1, PAD)
        p_stack = jnp.concatenate([self.a_stack, m_stack, iv_stack], axis=1)
        z_c_stack = jnp.stack(zc_pads)                   # (L+1, n_unlab, PAD)

        u_top = y_c[batch_size:]                          # `unlabeled(y_c)` glue
        u_top = jnp.pad(u_top.astype(jnp.float32),
                        ((0, 0), (0, PAD - u_top.shape[1])))

        out = fused_decoder_call(u_top, z_c_stack, self.V_stack, p_stack)

        # Slice the lane-dense slab back to per-layer widths.
        return {l: out[l, :, :self.layer_sizes[l]] for l in range(L + 1)}


# ----------------------------------------------------------------------------- reference
def reference_decoder(dec, y_c, clean, corr, batch_size):
    z_est = {}
    z_est_bn = {}
    for l in range(dec.L, -1, -1):
        z_c = corr['unlabeled']['z'][l]
        m = clean['unlabeled']['m'].get(l, 0)
        v = clean['unlabeled']['v'].get(l, 1 - 1e-10)
        if l == dec.L:
            u = y_c[batch_size:]
        else:
            u = z_est[l + 1] @ dec.V[l]
        mean = u.mean(0)
        var = u.var(0, ddof=1)
        u = (u - mean) / jnp.sqrt(var + EPS_BN)
        a = dec.a[l]
        mu = a[0] * jax.nn.sigmoid(a[1] * u + a[2]) + a[3] * u + a[4]
        vv = a[5] * jax.nn.sigmoid(a[6] * u + a[7]) + a[8] * u + a[9]
        ze = (z_c - mu) * vv + mu
        z_est[l] = ze
        z_est_bn[l] = (ze - jnp.asarray(m, jnp.float32)) / jnp.asarray(v, jnp.float32)
    return z_est_bn


# ----------------------------------------------------------------------------- main
if __name__ == "__main__":
    key = jax.random.PRNGKey(0)
    k_params, k_y, k_z0, k_z1, k_z2, k_m0, k_v0, k_m1, k_v1 = jax.random.split(key, 9)

    layer_sizes = [32, 16, 8]   # L = 2
    batch_size = 4              # labeled batch size; y_c = [labeled; unlabeled]
    n_unlab = 8                 # multiple of 8 -> full f32 sublane tile

    dec = Decoder(layer_sizes, k_params)

    # y_c: encoder output over [labeled; unlabeled] rows, shape (bs + n_unlab, top)
    y_c = jax.random.normal(k_y, (batch_size + n_unlab, layer_sizes[-1]), jnp.float32)

    corr_z = {
        0: jax.random.normal(k_z0, (n_unlab, layer_sizes[0]), jnp.float32),
        1: jax.random.normal(k_z1, (n_unlab, layer_sizes[1]), jnp.float32),
        2: jax.random.normal(k_z2, (n_unlab, layer_sizes[2]), jnp.float32),
    }
    clean_z = {l: z + 0.0 for l, z in corr_z.items()}  # unused by forward, kept for fidelity

    # batch-norm stats for lower layers only (top layer uses defaults 0, 1-1e-10)
    clean_m = {
        0: 0.1 * jax.random.normal(k_m0, (layer_sizes[0],), jnp.float32),
        1: 0.1 * jax.random.normal(k_m1, (layer_sizes[1],), jnp.float32),
    }
    clean_v = {
        0: 1.0 + 0.1 * jax.random.uniform(k_v0, (layer_sizes[0],), jnp.float32),
        1: 1.0 + 0.1 * jax.random.uniform(k_v1, (layer_sizes[1],), jnp.float32),
    }

    clean = {'unlabeled': {'z': clean_z, 'm': clean_m, 'v': clean_v}}
    corr = {'unlabeled': {'z': corr_z}}

    out = dec(y_c, clean, corr, batch_size)
    for l in out:
        jax.block_until_ready(out[l])

    ref = reference_decoder(dec, y_c, clean, corr, batch_size)
    for l in out:
        assert out[l].shape == (n_unlab, layer_sizes[l])
        assert jnp.allclose(out[l], ref[l], atol=1e-4, rtol=1e-4), f"layer {l} mismatch"

    print("KERNEL_OK")
</pallas_src>

<mosaic_0001>
module attributes {stable_mosaic.version = 11 : i64} {
  func.func @fused_decoder_kernel(%arg0: memref<8x128xf32, #tpu.memory_space<vmem>>, %arg1: memref<3x8x128xf32, #tpu.memory_space<vmem>>, %arg2: memref<2x128x128xf32, #tpu.memory_space<vmem>>, %arg3: memref<3x12x128xf32, #tpu.memory_space<vmem>>, %arg4: memref<3x8x128xf32, #tpu.memory_space<vmem>>) attributes {dimension_semantics = [], scalar_prefetch = 0 : i64, scratch_operands = 0 : i64, tpu.core_type = #tpu.core_type<tc>} {
    %c0 = arith.constant 0 : index
    %c0_0 = arith.constant 0 : index
    %0 = vector.load %arg0[%c0, %c0_0] : memref<8x128xf32, #tpu.memory_space<vmem>>, vector<8x128xf32>
    %cst = arith.constant dense<0.000000e+00> : vector<128xf32>
    %1 = vector.multi_reduction <add>, %0, %cst [0] : vector<8x128xf32> to vector<128xf32>
    %2 = vector.shape_cast %1 : vector<128xf32> to vector<1x128xf32>
    %cst_1 = arith.constant 8.000000e+00 : f32
    %3 = vector.broadcast %cst_1 : f32 to vector<1x128xf32>
    %4 = arith.divf %2, %3 : vector<1x128xf32>
    %5 = vector.broadcast %4 : vector<1x128xf32> to vector<8x128xf32>
    %6 = arith.subf %0, %5 : vector<8x128xf32>
    %7 = arith.mulf %6, %6 : vector<8x128xf32>
    %cst_2 = arith.constant dense<0.000000e+00> : vector<128xf32>
    %8 = vector.multi_reduction <add>, %7, %cst_2 [0] : vector<8x128xf32> to vector<128xf32>
    %9 = vector.shape_cast %8 : vector<128xf32> to vector<1x128xf32>
    %cst_3 = arith.constant 0.142857149 : f32
    %10 = vector.broadcast %cst_3 : f32 to vector<1x128xf32>
    %11 = arith.mulf %9, %10 : vector<1x128xf32>
    %cst_4 = arith.constant 1.000000e-10 : f32
    %12 = vector.broadcast %cst_4 : f32 to vector<1x128xf32>
    %13 = arith.addf %11, %12 : vector<1x128xf32>
    %14 = math.rsqrt %13 : vector<1x128xf32>
    %15 = vector.broadcast %14 : vector<1x128xf32> to vector<8x128xf32>
    %16 = arith.mulf %6, %15 : vector<8x128xf32>
    %c2 = arith.constant 2 : index
    %c0_5 = arith.constant 0 : index
    %c0_6 = arith.constant 0 : index
    %17 = vector.load %arg3[%c2, %c0_5, %c0_6] : memref<3x12x128xf32, #tpu.memory_space<vmem>>, vector<1x12x128xf32>
    %18 = vector.shape_cast %17 : vector<1x12x128xf32> to vector<12x128xf32>
    %19 = vector.extract_strided_slice %18 {offsets = [0, 0], sizes = [1, 128], strides = [1, 1]} : vector<12x128xf32> to vector<1x128xf32>
    %20 = vector.extract_strided_slice %18 {offsets = [1, 0], sizes = [1, 128], strides = [1, 1]} : vector<12x128xf32> to vector<1x128xf32>
    %21 = vector.extract_strided_slice %18 {offsets = [2, 0], sizes = [1, 128], strides = [1, 1]} : vector<12x128xf32> to vector<1x128xf32>
    %22 = vector.extract_strided_slice %18 {offsets = [3, 0], sizes = [1, 128], strides = [1, 1]} : vector<12x128xf32> to vector<1x128xf32>
    %23 = vector.extract_strided_slice %18 {offsets = [4, 0], sizes = [1, 128], strides = [1, 1]} : vector<12x128xf32> to vector<1x128xf32>
    %24 = vector.extract_strided_slice %18 {offsets = [5, 0], sizes = [1, 128], strides = [1, 1]} : vector<12x128xf32> to vector<1x128xf32>
    %25 = vector.extract_strided_slice %18 {offsets = [6, 0], sizes = [1, 128], strides = [1, 1]} : vector<12x128xf32> to vector<1x128xf32>
    %26 = vector.extract_strided_slice %18 {offsets = [7, 0], sizes = [1, 128], strides = [1, 1]} : vector<12x128xf32> to vector<1x128xf32>
    %27 = vector.extract_strided_slice %18 {offsets = [8, 0], sizes = [1, 128], strides = [1, 1]} : vector<12x128xf32> to vector<1x128xf32>
    %28 = vector.extract_strided_slice %18 {offsets = [9, 0], sizes = [1, 128], strides = [1, 1]} : vector<12x128xf32> to vector<1x128xf32>
    %29 = vector.extract_strided_slice %18 {offsets = [10, 0], sizes = [1, 128], strides = [1, 1]} : vector<12x128xf32> to vector<1x128xf32>
    %30 = vector.extract_strided_slice %18 {offsets = [11, 0], sizes = [1, 128], strides = [1, 1]} : vector<12x128xf32> to vector<1x128xf32>
    %31 = vector.broadcast %20 : vector<1x128xf32> to vector<8x128xf32>
    %32 = arith.mulf %31, %16 : vector<8x128xf32>
    %33 = vector.broadcast %21 : vector<1x128xf32> to vector<8x128xf32>
    %34 = arith.addf %32, %33 : vector<8x128xf32>
    %35 = arith.negf %34 : vector<8x128xf32>
    %36 = math.exp %35 : vector<8x128xf32>
    %cst_7 = arith.constant 1.000000e+00 : f32
    %37 = vector.broadcast %cst_7 : f32 to vector<8x128xf32>
    %38 = arith.addf %37, %36 : vector<8x128xf32>
    %39 = arith.divf %37, %38 : vector<8x128xf32>
    %40 = vector.broadcast %19 : vector<1x128xf32> to vector<8x128xf32>
    %41 = arith.mulf %40, %39 : vector<8x128xf32>
    %42 = vector.broadcast %22 : vector<1x128xf32> to vector<8x128xf32>
    %43 = arith.mulf %42, %16 : vector<8x128xf32>
    %44 = arith.addf %41, %43 : vector<8x128xf32>
    %45 = vector.broadcast %23 : vector<1x128xf32> to vector<8x128xf32>
    %46 = arith.addf %44, %45 : vector<8x128xf32>
    %47 = vector.broadcast %25 : vector<1x128xf32> to vector<8x128xf32>
    %48 = arith.mulf %47, %16 : vector<8x128xf32>
    %49 = vector.broadcast %26 : vector<1x128xf32> to vector<8x128xf32>
    %50 = arith.addf %48, %49 : vector<8x128xf32>
    %51 = arith.negf %50 : vector<8x128xf32>
    %52 = math.exp %51 : vector<8x128xf32>
    %cst_8 = arith.constant 1.000000e+00 : f32
    %53 = vector.broadcast %cst_8 : f32 to vector<8x128xf32>
    %54 = arith.addf %53, %52 : vector<8x128xf32>
    %55 = arith.divf %53, %54 : vector<8x128xf32>
    %56 = vector.broadcast %24 : vector<1x128xf32> to vector<8x128xf32>
    %57 = arith.mulf %56, %55 : vector<8x128xf32>
    %58 = vector.broadcast %27 : vector<1x128xf32> to vector<8x128xf32>
    %59 = arith.mulf %58, %16 : vector<8x128xf32>
    %60 = arith.addf %57, %59 : vector<8x128xf32>
    %61 = vector.broadcast %28 : vector<1x128xf32> to vector<8x128xf32>
    %62 = arith.addf %60, %61 : vector<8x128xf32>
    %c2_9 = arith.constant 2 : index
    %c0_10 = arith.constant 0 : index
    %c0_11 = arith.constant 0 : index
    %63 = vector.load %arg1[%c2_9, %c0_10, %c0_11] : memref<3x8x128xf32, #tpu.memory_space<vmem>>, vector<1x8x128xf32>
    %64 = vector.shape_cast %63 : vector<1x8x128xf32> to vector<8x128xf32>
    %65 = arith.subf %64, %46 : vector<8x128xf32>
    %66 = arith.mulf %65, %62 : vector<8x128xf32>
    %67 = arith.addf %66, %46 : vector<8x128xf32>
    %68 = vector.broadcast %29 : vector<1x128xf32> to vector<8x128xf32>
    %69 = arith.subf %67, %68 : vector<8x128xf32>
    %70 = vector.broadcast %30 : vector<1x128xf32> to vector<8x128xf32>
    %71 = arith.mulf %69, %70 : vector<8x128xf32>
    %c2_12 = arith.constant 2 : index
    %c0_13 = arith.constant 0 : index
    %c0_14 = arith.constant 0 : index
    %72 = vector.load %arg4[%c2_12, %c0_13, %c0_14] : memref<3x8x128xf32, #tpu.memory_space<vmem>>, vector<1x8x128xf32>
    %73 = vector.shape_cast %72 : vector<1x8x128xf32> to vector<8x128xf32>
    %74 = vector.shape_cast %71 : vector<8x128xf32> to vector<1x8x128xf32>
    tpu.vector_store %arg4[%c2_12, %c0_13, %c0_14], %74 {strides = array<i32>} : memref<3x8x128xf32, #tpu.memory_space<vmem>>, vector<1x8x128xf32>,
    %c1 = arith.constant 1 : index
    %c0_15 = arith.constant 0 : index
    %c0_16 = arith.constant 0 : index
    %75 = vector.load %arg2[%c1, %c0_15, %c0_16] : memref<2x128x128xf32, #tpu.memory_space<vmem>>, vector<1x128x128xf32>
    %76 = vector.shape_cast %75 : vector<1x128x128xf32> to vector<128x128xf32>
    %cst_17 = arith.constant dense<0.000000e+00> : vector<8x128xf32>
    %77 = tpu.matmul %67, %76, %cst_17 {dimension_numbers = #tpu.dot_dimension_numbers<[1], [0], [0], [1], [0, 0, 1, 1], [], []>} : vector<8x128xf32>, vector<128x128xf32>, vector<8x128xf32> -> vector<8x128xf32>
    %cst_18 = arith.constant dense<0.000000e+00> : vector<128xf32>
    %78 = vector.multi_reduction <add>, %77, %cst_18 [0] : vector<8x128xf32> to vector<128xf32>
    %79 = vector.shape_cast %78 : vector<128xf32> to vector<1x128xf32>
    %cst_19 = arith.constant 8.000000e+00 : f32
    %80 = vector.broadcast %cst_19 : f32 to vector<1x128xf32>
    %81 = arith.divf %79, %80 : vector<1x128xf32>
    %82 = vector.broadcast %81 : vector<1x128xf32> to vector<8x128xf32>
    %83 = arith.subf %77, %82 : vector<8x128xf32>
    %84 = arith.mulf %83, %83 : vector<8x128xf32>
    %cst_20 = arith.constant dense<0.000000e+00> : vector<128xf32>
    %85 = vector.multi_reduction <add>, %84, %cst_20 [0] : vector<8x128xf32> to vector<128xf32>
    %86 = vector.shape_cast %85 : vector<128xf32> to vector<1x128xf32>
    %cst_21 = arith.constant 0.142857149 : f32
    %87 = vector.broadcast %cst_21 : f32 to vector<1x128xf32>
    %88 = arith.mulf %86, %87 : vector<1x128xf32>
    %cst_22 = arith.constant 1.000000e-10 : f32
    %89 = vector.broadcast %cst_22 : f32 to vector<1x128xf32>
    %90 = arith.addf %88, %89 : vector<1x128xf32>
    %91 = math.rsqrt %90 : vector<1x128xf32>
    %92 = vector.broadcast %91 : vector<1x128xf32> to vector<8x128xf32>
    %93 = arith.mulf %83, %92 : vector<8x128xf32>
    %c1_23 = arith.constant 1 : index
    %c0_24 = arith.constant 0 : index
    %c0_25 = arith.constant 0 : index
    %94 = vector.load %arg3[%c1_23, %c0_24, %c0_25] : memref<3x12x128xf32, #tpu.memory_space<vmem>>, vector<1x12x128xf32>
    %95 = vector.shape_cast %94 : vector<1x12x128xf32> to vector<12x128xf32>
    %96 = vector.extract_strided_slice %95 {offsets = [0, 0], sizes = [1, 128], strides = [1, 1]} : vector<12x128xf32> to vector<1x128xf32>
    %97 = vector.extract_strided_slice %95 {offsets = [1, 0], sizes = [1, 128], strides = [1, 1]} : vector<12x128xf32> to vector<1x128xf32>
    %98 = vector.extract_strided_slice %95 {offsets = [2, 0], sizes = [1, 128], strides = [1, 1]} : vector<12x128xf32> to vector<1x128xf32>
    %99 = vector.extract_strided_slice %95 {offsets = [3, 0], sizes = [1, 128], strides = [1, 1]} : vector<12x128xf32> to vector<1x128xf32>
    %100 = vector.extract_strided_slice %95 {offsets = [4, 0], sizes = [1, 128], strides = [1, 1]} : vector<12x128xf32> to vector<1x128xf32>
    %101 = vector.extract_strided_slice %95 {offsets = [5, 0], sizes = [1, 128], strides = [1, 1]} : vector<12x128xf32> to vector<1x128xf32>
    %102 = vector.extract_strided_slice %95 {offsets = [6, 0], sizes = [1, 128], strides = [1, 1]} : vector<12x128xf32> to vector<1x128xf32>
    %103 = vector.extract_strided_slice %95 {offsets = [7, 0], sizes = [1, 128], strides = [1, 1]} : vector<12x128xf32> to vector<1x128xf32>
    %104 = vector.extract_strided_slice %95 {offsets = [8, 0], sizes = [1, 128], strides = [1, 1]} : vector<12x128xf32> to vector<1x128xf32>
    %105 = vector.extract_strided_slice %95 {offsets = [9, 0], sizes = [1, 128], strides = [1, 1]} : vector<12x128xf32> to vector<1x128xf32>
    %106 = vector.extract_strided_slice %95 {offsets = [10, 0], sizes = [1, 128], strides = [1, 1]} : vector<12x128xf32> to vector<1x128xf32>
    %107 = vector.extract_strided_slice %95 {offsets = [11, 0], sizes = [1, 128], strides = [1, 1]} : vector<12x128xf32> to vector<1x128xf32>
    %108 = vector.broadcast %97 : vector<1x128xf32> to vector<8x128xf32>
    %109 = arith.mulf %108, %93 : vector<8x128xf32>
    %110 = vector.broadcast %98 : vector<1x128xf32> to vector<8x128xf32>
    %111 = arith.addf %109, %110 : vector<8x128xf32>
    %112 = arith.negf %111 : vector<8x128xf32>
    %113 = math.exp %112 : vector<8x128xf32>
    %cst_26 = arith.constant 1.000000e+00 : f32
    %114 = vector.broadcast %cst_26 : f32 to vector<8x128xf32>
    %115 = arith.addf %114, %113 : vector<8x128xf32>
    %116 = arith.divf %114, %115 : vector<8x128xf32>
    %117 = vector.broadcast %96 : vector<1x128xf32> to vector<8x128xf32>
    %118 = arith.mulf %117, %116 : vector<8x128xf32>
    %119 = vector.broadcast %99 : vector<1x128xf32> to vector<8x128xf32>
    %120 = arith.mulf %119, %93 : vector<8x128xf32>
    %121 = arith.addf %118, %120 : vector<8x128xf32>
    %122 = vector.broadcast %100 : vector<1x128xf32> to vector<8x128xf32>
    %123 = arith.addf %121, %122 : vector<8x128xf32>
    %124 = vector.broadcast %102 : vector<1x128xf32> to vector<8x128xf32>
    %125 = arith.mulf %124, %93 : vector<8x128xf32>
    %126 = vector.broadcast %103 : vector<1x128xf32> to vector<8x128xf32>
    %127 = arith.addf %125, %126 : vector<8x128xf32>
    %128 = arith.negf %127 : vector<8x128xf32>
    %129 = math.exp %128 : vector<8x128xf32>
    %cst_27 = arith.constant 1.000000e+00 : f32
    %130 = vector.broadcast %cst_27 : f32 to vector<8x128xf32>
    %131 = arith.addf %130, %129 : vector<8x128xf32>
    %132 = arith.divf %130, %131 : vector<8x128xf32>
    %133 = vector.broadcast %101 : vector<1x128xf32> to vector<8x128xf32>
    %134 = arith.mulf %133, %132 : vector<8x128xf32>
    %135 = vector.broadcast %104 : vector<1x128xf32> to vector<8x128xf32>
    %136 = arith.mulf %135, %93 : vector<8x128xf32>
    %137 = arith.addf %134, %136 : vector<8x128xf32>
    %138 = vector.broadcast %105 : vector<1x128xf32> to vector<8x128xf32>
    %139 = arith.addf %137, %138 : vector<8x128xf32>
    %c1_28 = arith.constant 1 : index
    %c0_29 = arith.constant 0 : index
    %c0_30 = arith.constant 0 : index
    %140 = vector.load %arg1[%c1_28, %c0_29, %c0_30] : memref<3x8x128xf32, #tpu.memory_space<vmem>>, vector<1x8x128xf32>
    %141 = vector.shape_cast %140 : vector<1x8x128xf32> to vector<8x128xf32>
    %142 = arith.subf %141, %123 : vector<8x128xf32>
    %143 = arith.mulf %142, %139 : vector<8x128xf32>
    %144 = arith.addf %143, %123 : vector<8x128xf32>
    %145 = vector.broadcast %106 : vector<1x128xf32> to vector<8x128xf32>
    %146 = arith.subf %144, %145 : vector<8x128xf32>
    %147 = vector.broadcast %107 : vector<1x128xf32> to vector<8x128xf32>
    %148 = arith.mulf %146, %147 : vector<8x128xf32>
    %c1_31 = arith.constant 1 : index
    %c0_32 = arith.constant 0 : index
    %c0_33 = arith.constant 0 : index
    %149 = vector.load %arg4[%c1_31, %c0_32, %c0_33] : memref<3x8x128xf32, #tpu.memory_space<vmem>>, vector<1x8x128xf32>
    %150 = vector.shape_cast %149 : vector<1x8x128xf32> to vector<8x128xf32>
    %151 = vector.shape_cast %148 : vector<8x128xf32> to vector<1x8x128xf32>
    tpu.vector_store %arg4[%c1_31, %c0_32, %c0_33], %151 {strides = array<i32>} : memref<3x8x128xf32, #tpu.memory_space<vmem>>, vector<1x8x128xf32>,
    %c0_34 = arith.constant 0 : index
    %c0_35 = arith.constant 0 : index
    %c0_36 = arith.constant 0 : index
    %152 = vector.load %arg2[%c0_34, %c0_35, %c0_36] : memref<2x128x128xf32, #tpu.memory_space<vmem>>, vector<1x128x128xf32>
    %153 = vector.shape_cast %152 : vector<1x128x128xf32> to vector<128x128xf32>
    %cst_37 = arith.constant dense<0.000000e+00> : vector<8x128xf32>
    %154 = tpu.matmul %144, %153, %cst_37 {dimension_numbers = #tpu.dot_dimension_numbers<[1], [0], [0], [1], [0, 0, 1, 1], [], []>} : vector<8x128xf32>, vector<128x128xf32>, vector<8x128xf32> -> vector<8x128xf32>
    %cst_38 = arith.constant dense<0.000000e+00> : vector<128xf32>
    %155 = vector.multi_reduction <add>, %154, %cst_38 [0] : vector<8x128xf32> to vector<128xf32>
    %156 = vector.shape_cast %155 : vector<128xf32> to vector<1x128xf32>
    %cst_39 = arith.constant 8.000000e+00 : f32
    %157 = vector.broadcast %cst_39 : f32 to vector<1x128xf32>
    %158 = arith.divf %156, %157 : vector<1x128xf32>
    %159 = vector.broadcast %158 : vector<1x128xf32> to vector<8x128xf32>
    %160 = arith.subf %154, %159 : vector<8x128xf32>
    %161 = arith.mulf %160, %160 : vector<8x128xf32>
    %cst_40 = arith.constant dense<0.000000e+00> : vector<128xf32>
    %162 = vector.multi_reduction <add>, %161, %cst_40 [0] : vector<8x128xf32> to vector<128xf32>
    %163 = vector.shape_cast %162 : vector<128xf32> to vector<1x128xf32>
    %cst_41 = arith.constant 0.142857149 : f32
    %164 = vector.broadcast %cst_41 : f32 to vector<1x128xf32>
    %165 = arith.mulf %163, %164 : vector<1x128xf32>
    %cst_42 = arith.constant 1.000000e-10 : f32
    %166 = vector.broadcast %cst_42 : f32 to vector<1x128xf32>
    %167 = arith.addf %165, %166 : vector<1x128xf32>
    %168 = math.rsqrt %167 : vector<1x128xf32>
    %169 = vector.broadcast %168 : vector<1x128xf32> to vector<8x128xf32>
    %170 = arith.mulf %160, %169 : vector<8x128xf32>
    %c0_43 = arith.constant 0 : index
    %c0_44 = arith.constant 0 : index
    %c0_45 = arith.constant 0 : index
    %171 = vector.load %arg3[%c0_43, %c0_44, %c0_45] : memref<3x12x128xf32, #tpu.memory_space<vmem>>, vector<1x12x128xf32>
    %172 = vector.shape_cast %171 : vector<1x12x128xf32> to vector<12x128xf32>
    %173 = vector.extract_strided_slice %172 {offsets = [0, 0], sizes = [1, 128], strides = [1, 1]} : vector<12x128xf32> to vector<1x128xf32>
    %174 = vector.extract_strided_slice %172 {offsets = [1, 0], sizes = [1, 128], strides = [1, 1]} : vector<12x128xf32> to vector<1x128xf32>
    %175 = vector.extract_strided_slice %172 {offsets = [2, 0], sizes = [1, 128], strides = [1, 1]} : vector<12x128xf32> to vector<1x128xf32>
    %176 = vector.extract_strided_slice %172 {offsets = [3, 0], sizes = [1, 128], strides = [1, 1]} : vector<12x128xf32> to vector<1x128xf32>
    %177 = vector.extract_strided_slice %172 {offsets = [4, 0], sizes = [1, 128], strides = [1, 1]} : vector<12x128xf32> to vector<1x128xf32>
    %178 = vector.extract_strided_slice %172 {offsets = [5, 0], sizes = [1, 128], strides = [1, 1]} : vector<12x128xf32> to vector<1x128xf32>
    %179 = vector.extract_strided_slice %172 {offsets = [6, 0], sizes = [1, 128], strides = [1, 1]} : vector<12x128xf32> to vector<1x128xf32>
    %180 = vector.extract_strided_slice %172 {offsets = [7, 0], sizes = [1, 128], strides = [1, 1]} : vector<12x128xf32> to vector<1x128xf32>
    %181 = vector.extract_strided_slice %172 {offsets = [8, 0], sizes = [1, 128], strides = [1, 1]} : vector<12x128xf32> to vector<1x128xf32>
    %182 = vector.extract_strided_slice %172 {offsets = [9, 0], sizes = [1, 128], strides = [1, 1]} : vector<12x128xf32> to vector<1x128xf32>
    %183 = vector.extract_strided_slice %172 {offsets = [10, 0], sizes = [1, 128], strides = [1, 1]} : vector<12x128xf32> to vector<1x128xf32>
    %184 = vector.extract_strided_slice %172 {offsets = [11, 0], sizes = [1, 128], strides = [1, 1]} : vector<12x128xf32> to vector<1x128xf32>
    %185 = vector.broadcast %174 : vector<1x128xf32> to vector<8x128xf32>
    %186 = arith.mulf %185, %170 : vector<8x128xf32>
    %187 = vector.broadcast %175 : vector<1x128xf32> to vector<8x128xf32>
    %188 = arith.addf %186, %187 : vector<8x128xf32>
    %189 = arith.negf %188 : vector<8x128xf32>
    %190 = math.exp %189 : vector<8x128xf32>
    %cst_46 = arith.constant 1.000000e+00 : f32
    %191 = vector.broadcast %cst_46 : f32 to vector<8x128xf32>
    %192 = arith.addf %191, %190 : vector<8x128xf32>
    %193 = arith.divf %191, %192 : vector<8x128xf32>
    %194 = vector.broadcast %173 : vector<1x128xf32> to vector<8x128xf32>
    %195 = arith.mulf %194, %193 : vector<8x128xf32>
    %196 = vector.broadcast %176 : vector<1x128xf32> to vector<8x128xf32>
    %197 = arith.mulf %196, %170 : vector<8x128xf32>
    %198 = arith.addf %195, %197 : vector<8x128xf32>
    %199 = vector.broadcast %177 : vector<1x128xf32> to vector<8x128xf32>
    %200 = arith.addf %198, %199 : vector<8x128xf32>
    %201 = vector.broadcast %179 : vector<1x128xf32> to vector<8x128xf32>
    %202 = arith.mulf %201, %170 : vector<8x128xf32>
    %203 = vector.broadcast %180 : vector<1x128xf32> to vector<8x128xf32>
    %204 = arith.addf %202, %203 : vector<8x128xf32>
    %205 = arith.negf %204 : vector<8x128xf32>
    %206 = math.exp %205 : vector<8x128xf32>
    %cst_47 = arith.constant 1.000000e+00 : f32
    %207 = vector.broadcast %cst_47 : f32 to vector<8x128xf32>
    %208 = arith.addf %207, %206 : vector<8x128xf32>
    %209 = arith.divf %207, %208 : vector<8x128xf32>
    %210 = vector.broadcast %178 : vector<1x128xf32> to vector<8x128xf32>
    %211 = arith.mulf %210, %209 : vector<8x128xf32>
    %212 = vector.broadcast %181 : vector<1x128xf32> to vector<8x128xf32>
    %213 = arith.mulf %212, %170 : vector<8x128xf32>
    %214 = arith.addf %211, %213 : vector<8x128xf32>
    %215 = vector.broadcast %182 : vector<1x128xf32> to vector<8x128xf32>
    %216 = arith.addf %214, %215 : vector<8x128xf32>
    %c0_48 = arith.constant 0 : index
    %c0_49 = arith.constant 0 : index
    %c0_50 = arith.constant 0 : index
    %217 = vector.load %arg1[%c0_48, %c0_49, %c0_50] : memref<3x8x128xf32, #tpu.memory_space<vmem>>, vector<1x8x128xf32>
    %218 = vector.shape_cast %217 : vector<1x8x128xf32> to vector<8x128xf32>
    %219 = arith.subf %218, %200 : vector<8x128xf32>
    %220 = arith.mulf %219, %216 : vector<8x128xf32>
    %221 = arith.addf %220, %200 : vector<8x128xf32>
    %222 = vector.broadcast %183 : vector<1x128xf32> to vector<8x128xf32>
    %223 = arith.subf %221, %222 : vector<8x128xf32>
    %224 = vector.broadcast %184 : vector<1x128xf32> to vector<8x128xf32>
    %225 = arith.mulf %223, %224 : vector<8x128xf32>
    %c0_51 = arith.constant 0 : index
    %c0_52 = arith.constant 0 : index
    %c0_53 = arith.constant 0 : index
    %226 = vector.load %arg4[%c0_51, %c0_52, %c0_53] : memref<3x8x128xf32, #tpu.memory_space<vmem>>, vector<1x8x128xf32>
    %227 = vector.shape_cast %226 : vector<1x8x128xf32> to vector<8x128xf32>
    %228 = vector.shape_cast %225 : vector<8x128xf32> to vector<1x8x128xf32>
    tpu.vector_store %arg4[%c0_51, %c0_52, %c0_53], %228 {strides = array<i32>} : memref<3x8x128xf32, #tpu.memory_space<vmem>>, vector<1x8x128xf32>,
    return
  }
}

</mosaic_0001>

<llo_original>
// kernel: fused_decoder_call.1
$region0: #{fused_decoder_call.1}
  #allocation0 [shape = 'u32[]', space=smem, size = 0x4, offset = 0x4, fixed_abs, tag = 'smem constant byte address 0x4 - core index']
  #allocation1 [shape = 'u32[144,128]{1,0:T(1,128)}', space=vmem, size = 0x12000, scoped, tag = 'internal scratch']
  %s0 = inlined_call_operand.hbm [shape: f32[8,128], index: 0, kind: input, shape index: {}]
  %s1 = inlined_call_operand.hbm [shape: f32[3,8,128], index: 1, kind: input, shape index: {}]
  %s2 = inlined_call_operand.hbm [shape: f32[2,128,128], index: 2, kind: input, shape index: {}]
  %s3 = inlined_call_operand.hbm [shape: f32[3,12,128], index: 3, kind: input, shape index: {}]
  %s4 = inlined_call_operand.hbm [shape: f32[3,8,128], index: 4, kind: output, shape index: {}]
  %s5 = sld [smem:[#allocation0]]
  $region42: #{fused_decoder_call.1} parent=0
    _
  %s7 = ssub.s32 1, %s5
  %s8 = scalar_select 0, %s7, %s5
  $region1: #{fused_decoder_call.1} parent=0
    #allocation2 [shape = 'u8[4096]{0}', space=vmem, size = 0x1000, scoped, tag = 'input window, operand 0, single buffered']
    #allocation3 [shape = 's32[1]{0}', space=sflag, size = 0x4, scoped, tag = 'scoped memory for fused_decoder_call.1']
    #allocation4 [shape = 's32[1]{0}', space=sflag, size = 0x4, scoped, tag = 'scoped memory for fused_decoder_call.1']
    #allocation5 [shape = 'u8[12288]{0}', space=vmem, size = 0x3000, scoped, tag = 'input window, operand 1, single buffered']
    #allocation6 [shape = 's32[1]{0}', space=sflag, size = 0x4, scoped, tag = 'scoped memory for fused_decoder_call.1']
    #allocation7 [shape = 'u8[131072]{0}', space=vmem, size = 0x20000, scoped, tag = 'input window, operand 2, single buffered']
    #allocation8 [shape = 'u8[24576]{0}', space=vmem, size = 0x6000, scoped, tag = 'input window, operand 3, single buffered']
    #allocation9 [shape = 's32[1]{0}', space=sflag, size = 0x4, scoped, tag = 'scoped memory for fused_decoder_call.1']
    #allocation10 [shape = 'u8[12288]{0}', space=vmem, size = 0x3000, scoped, tag = 'output window, operand 0, single buffered']
    %9 = vsyncpa [#allocation3], 0
    %10 = vsyncpa [#allocation6], 0
    %11 = vsyncpa [#allocation9], 0
    %12 = vsyncpa [#allocation4], 0
    // Predicated region
    $region2: #{fused_decoder_call.1} parent=1 // pred_check
      _
    $region3: #{fused_decoder_call.1} parent=1 // pred_check_branch
      %14 = sbr.rel (0) target = $region5
    $region4: #{fused_decoder_call.1} parent=1 // pred_region
      %s16 = ssub.s32 128, 128
      %17 = vsyncadd [#allocation3], %s16
      %s19 = sshll.u32 [#allocation2], 4
      %s20 = int_to_ptr.vmem [resolvable:$true] %s19
      %22 = dma.hbm_to_vmem [thread:$0]  %s0, 128, %s20, [#allocation3]
    $region5: #{fused_decoder_call.1} parent=1 // pred_fallthru
      _
    // Predicated region
    $region6: #{fused_decoder_call.1} parent=1 // pred_check
      _
    $region7: #{fused_decoder_call.1} parent=1 // pred_check_branch
      %24 = sbr.rel (0) target = $region9
    $region8: #{fused_decoder_call.1} parent=1 // pred_region
      %s26 = ssub.s32 384, 384
      %27 = vsyncadd [#allocation6], %s26
      %s28 = sshll.u32 [#allocation5], 4
      %s29 = int_to_ptr.vmem [resolvable:$true] %s28
      %34 = dma.hbm_to_vmem [thread:$0]  %s1, 384, %s29, [#allocation6], 128, 128, 8
    $region9: #{fused_decoder_call.1} parent=1 // pred_fallthru
      _
    // Predicated region
    $region10: #{fused_decoder_call.1} parent=1 // pred_check
      _
    $region11: #{fused_decoder_call.1} parent=1 // pred_check_branch
      %36 = sbr.rel (0) target = $region13
    $region12: #{fused_decoder_call.1} parent=1 // pred_region
      %s38 = ssub.s32 4096, 4096
      %39 = vsyncadd [#allocation6], %s38
      %s40 = sshll.u32 [#allocation7], 4
      %s41 = int_to_ptr.vmem [resolvable:$true] %s40
      %46 = dma.hbm_to_vmem [thread:$0]  %s2, 4096, %s41, [#allocation6], 128, 128, 8
    $region13: #{fused_decoder_call.1} parent=1 // pred_fallthru
      _
    // Predicated region
    $region14: #{fused_decoder_call.1} parent=1 // pred_check
      _
    $region15: #{fused_decoder_call.1} parent=1 // pred_check_branch
      %48 = sbr.rel (0) target = $region17
    $region16: #{fused_decoder_call.1} parent=1 // pred_region
      %s50 = ssub.s32 768, 768
      %51 = vsyncadd [#allocation9], %s50
      %s52 = sshll.u32 [#allocation8], 4
      %s53 = int_to_ptr.vmem [resolvable:$true] %s52
      %58 = dma.hbm_to_vmem [thread:$0]  %s3, 768, %s53, [#allocation9], 128, 128, 8
    $region17: #{fused_decoder_call.1} parent=1 // pred_fallthru
      _
    // Predicated region
    $region18: #{fused_decoder_call.1} parent=1 // pred_check
      _
    $region19: #{fused_decoder_call.1} parent=1 // pred_check_branch
      %60 = sbr.rel (0) target = $region21
    $region20: #{fused_decoder_call.1} parent=1 // pred_region
      %61 = dma.done [#allocation3], 128
    $region21: #{fused_decoder_call.1} parent=1 // pred_fallthru
      _
    // Predicated region
    $region22: #{fused_decoder_call.1} parent=1 // pred_check
      _
    $region23: #{fused_decoder_call.1} parent=1 // pred_check_branch
      %63 = sbr.rel (0) target = $region25
    $region24: #{fused_decoder_call.1} parent=1 // pred_region
      %64 = dma.done [#allocation6], 384
    $region25: #{fused_decoder_call.1} parent=1 // pred_fallthru
      _
    // Predicated region
    $region26: #{fused_decoder_call.1} parent=1 // pred_check
      _
    $region27: #{fused_decoder_call.1} parent=1 // pred_check_branch
      %66 = sbr.rel (0) target = $region29
    $region28: #{fused_decoder_call.1} parent=1 // pred_region
      %67 = dma.done [#allocation6], 4096
    $region29: #{fused_decoder_call.1} parent=1 // pred_fallthru
      _
    // Predicated region
    $region30: #{fused_decoder_call.1} parent=1 // pred_check
      _
    $region31: #{fused_decoder_call.1} parent=1 // pred_check_branch
      %69 = sbr.rel (0) target = $region33
    $region32: #{fused_decoder_call.1} parent=1 // pred_region
      %70 = dma.done [#allocation9], 768
    $region33: #{fused_decoder_call.1} parent=1 // pred_fallthru
      _
    %v71 = vld [vmem:[#allocation2] sm:$0xff]
    %v72 = vrot.slane %v71, 4
    %v73 = vadd.f32 %v71, %v72
    %v74 = vrot.slane %v73, 2
    %v75 = vadd.f32 %v73, %v74
    %v76 = vrot.slane %v75, 1
    %v77 = vadd.f32 %v75, %v76
    %v78 = vrcp.pop 8.0
    %v79 = vmul.f32 %v77, %v78
    %v80 = vsub.f32 %v71, %v79
    %v81 = vmul.f32 %v80, %v80
    %v82 = vrot.slane %v81, 4
    %v83 = vadd.f32 %v81, %v82
    %v84 = vrot.slane %v83, 2
    %v85 = vadd.f32 %v83, %v84
    %v86 = vrot.slane %v85, 1
    %v87 = vadd.f32 %v85, %v86
    %v88 = vmul.f32 %v87, 0.14285715
    %v89 = vadd.f32 %v88, 1e-10
    %v90 = vrsqrt.pop %v89
    %v91 = vmul.f32 %v80, %v90
    %s92 = scalar_lea.vmem [#allocation8], 32
    %v93 = vld [vmem:[%s92] sm:$0xff]
    %v94 = vld [vmem:[%s92 + $0x8] sm:$0xf]
    %v95 = vlaneseq
    %v96 = vshrl.u32 %v95, 7
    %v97 = vsub.s32 1, %v96
    %v98 = vrot.slane %v93, %v97
    %v99 = vmul.f32 %v98, %v91
    %v100 = vlaneseq
    %v101 = vshrl.u32 %v100, 7
    %v102 = vsub.s32 2, %v101
    %v103 = vrot.slane %v93, %v102
    %v104 = vadd.f32 %v99, %v103
    %v105 = vxor.u32 %v104, 2147483648
    %v106 = vmul.f32 %v105, 1.442695
    %v107 = vpow.pop %v106
    %v108 = vadd.f32 %v107, 1.0
    %v109 = vrcp.pop %v108
    %v110 = vmul.f32 1.0, %v109
    %v111 = vlaneseq
    %v112 = vshrl.u32 %v111, 7
    %v113 = vsub.s32 0, %v112
    %v114 = vrot.slane %v93, %v113
    %v115 = vmul.f32 %v114, %v110
    %v116 = vlaneseq
    %v117 = vshrl.u32 %v116, 7
    %v118 = vsub.s32 3, %v117
    %v119 = vrot.slane %v93, %v118
    %v120 = vmul.f32 %v119, %v91
    %v121 = vadd.f32 %v115, %v120
    %v122 = vlaneseq
    %v123 = vshrl.u32 %v122, 7
    %v124 = vsub.s32 4, %v123
    %v125 = vrot.slane %v93, %v124
    %v126 = vadd.f32 %v121, %v125
    %v127 = vlaneseq
    %v128 = vshrl.u32 %v127, 7
    %v129 = vsub.s32 6, %v128
    %v130 = vrot.slane %v93, %v129
    %v131 = vmul.f32 %v130, %v91
    %v132 = vlaneseq
    %v133 = vshrl.u32 %v132, 7
    %v134 = vsub.s32 7, %v133
    %v135 = vrot.slane %v93, %v134
    %v136 = vadd.f32 %v131, %v135
    %v137 = vxor.u32 %v136, 2147483648
    %v138 = vmul.f32 %v137, 1.442695
    %v139 = vpow.pop %v138
    %v140 = vadd.f32 %v139, 1.0
    %v141 = vrcp.pop %v140
    %v142 = vmul.f32 1.0, %v141
    %v143 = vlaneseq
    %v144 = vshrl.u32 %v143, 7
    %v145 = vsub.s32 5, %v144
    %v146 = vrot.slane %v93, %v145
    %v147 = vmul.f32 %v146, %v142
    %v148 = vlaneseq
    %v149 = vshrl.u32 %v148, 7
    %v150 = vsub.s32 0, %v149
    %v151 = vrot.slane %v94, %v150
    %v152 = vmul.f32 %v151, %v91
    %v153 = vadd.f32 %v147, %v152
    %v154 = vlaneseq
    %v155 = vshrl.u32 %v154, 7
    %v156 = vsub.s32 1, %v155
    %v157 = vrot.slane %v94, %v156
    %v158 = vadd.f32 %v153, %v157
    %s159 = scalar_lea.vmem [#allocation5], 16
    %v160 = vld [vmem:[%s159] sm:$0xff]
    %v161 = vsub.f32 %v160, %v126
    %v162 = vmul.f32 %v161, %v158
    %v163 = vadd.f32 %v162, %v126
    %v164 = vlaneseq
    %v165 = vshrl.u32 %v164, 7
    %v166 = vsub.s32 2, %v165
    %v167 = vrot.slane %v94, %v166
    %v168 = vsub.f32 %v163, %v167
    %v169 = vlaneseq
    %v170 = vshrl.u32 %v169, 7
    %v171 = vsub.s32 3, %v170
    %v172 = vrot.slane %v94, %v171
    %v173 = vmul.f32 %v168, %v172
    %s174 = scalar_lea.vmem [#allocation10], 16
    %175 = vst [vmem:[%s174] sm:$0xff] %v173
    %s176 = scalar_lea.vmem [#allocation7], 128
    %v177 = vld [vmem:[%s176] sm:$0xff]
    %v178 = vld [vmem:[%s176 + $0x8] sm:$0xff]
    %v179 = vld [vmem:[%s176 + $0x10] sm:$0xff]
    %v180 = vld [vmem:[%s176 + $0x18] sm:$0xff]
    %v181 = vld [vmem:[%s176 + $0x20] sm:$0xff]
    %v182 = vld [vmem:[%s176 + $0x28] sm:$0xff]
    %v183 = vld [vmem:[%s176 + $0x30] sm:$0xff]
    %v184 = vld [vmem:[%s176 + $0x38] sm:$0xff]
    %v185 = vld [vmem:[%s176 + $0x40] sm:$0xff]
    %v186 = vld [vmem:[%s176 + $0x48] sm:$0xff]
    %v187 = vld [vmem:[%s176 + $0x50] sm:$0xff]
    %v188 = vld [vmem:[%s176 + $0x58] sm:$0xff]
    %v189 = vld [vmem:[%s176 + $0x60] sm:$0xff]
    %v190 = vld [vmem:[%s176 + $0x68] sm:$0xff]
    %v191 = vld [vmem:[%s176 + $0x70] sm:$0xff]
    %v192 = vld [vmem:[%s176 + $0x78] sm:$0xff]
    %193 = vmatprep.subr.mxu0 0.0
    %194 = vmatpush1.msra.mxu0 %v177
    %195 = vmatprep.subr.mxu0 0.0
    %196 = vmatpush1.msra.mxu0 %v178
    %197 = vmatprep.subr.mxu0 0.0
    %198 = vmatpush1.msra.mxu0 %v179
    %199 = vmatprep.subr.mxu0 0.0
    %200 = vmatpush1.msra.mxu0 %v180
    %201 = vmatprep.subr.mxu0 0.0
    %202 = vmatpush1.msra.mxu0 %v181
    %203 = vmatprep.subr.mxu0 0.0
    %204 = vmatpush1.msra.mxu0 %v182
    %205 = vmatprep.subr.mxu0 0.0
    %206 = vmatpush1.msra.mxu0 %v183
    %207 = vmatprep.subr.mxu0 0.0
    %208 = vmatpush1.msra.mxu0 %v184
    %209 = vmatprep.subr.mxu0 0.0
    %210 = vmatpush1.msra.mxu0 %v185
    %211 = vmatprep.subr.mxu0 0.0
    %212 = vmatpush1.msra.mxu0 %v186
    %213 = vmatprep.subr.mxu0 0.0
    %214 = vmatpush1.msra.mxu0 %v187
    %215 = vmatprep.subr.mxu0 0.0
    %216 = vmatpush1.msra.mxu0 %v188
    %217 = vmatprep.subr.mxu0 0.0
    %218 = vmatpush1.msra.mxu0 %v189
    %219 = vmatprep.subr.mxu0 0.0
    %220 = vmatpush1.msra.mxu0 %v190
    %221 = vmatprep.subr.mxu0 0.0
    %222 = vmatpush1.msra.mxu0 %v191
    %223 = vmatprep.subr.mxu0 0.0
    %224 = vmatpush1.msra.mxu0 %v192
    %225 = vmatprep.subr.mxu0 0.0
    %226 = vmatpush1.msra.mxu0 0.0
    %227 = vmatprep.subr.mxu0 0.0
    %228 = vmatpush1.msra.mxu0 0.0
    %229 = vmatprep.subr.mxu0 0.0
    %230 = vmatpush1.msra.mxu0 0.0
    %231 = vmatprep.subr.mxu0 0.0
    %232 = vmatpush1.msra.mxu0 0.0
    %233 = vmatprep.subr.mxu0 0.0
    %234 = vmatpush1.msra.mxu0 0.0
    %235 = vmatprep.subr.mxu0 0.0
    %236 = vmatpush1.msra.mxu0 0.0
    %237 = vmatprep.subr.mxu0 0.0
    %238 = vmatpush1.msra.mxu0 0.0
    %239 = vmatprep.subr.mxu0 0.0
    %240 = vmatpush1.msra.mxu0 0.0
    %241 = vmatprep.subr.mxu0 0.0
    %242 = vmatpush1.msra.mxu0 0.0
    %243 = vmatprep.subr.mxu0 0.0
    %244 = vmatpush1.msra.mxu0 0.0
    %245 = vmatprep.subr.mxu0 0.0
    %246 = vmatpush1.msra.mxu0 0.0
    %247 = vmatprep.subr.mxu0 0.0
    %248 = vmatpush1.msra.mxu0 0.0
    %249 = vmatprep.subr.mxu0 0.0
    %250 = vmatpush1.msra.mxu0 0.0
    %251 = vmatprep.subr.mxu0 0.0
    %252 = vmatpush1.msra.mxu0 0.0
    %253 = vmatprep.subr.mxu0 0.0
    %254 = vmatpush1.msra.mxu0 0.0
    %255 = vmatprep.subr.mxu0 0.0
    %256 = vmatpush1.msra.mxu0 0.0
    %257 = vmatprep.mubr.f32.mxu0 0.0
    %258 = vmatmul.mubr.f32.gmra.mrb[0].mxu0 %v163
    %v259 = vpop.f32.mrb[0].mxu0
    %v260 = vadd.f32 0.0, %v259
    %v261 = vpop.f32.mrb[0].mxu0
    %262 = vdwg.mxu0
    %v263 = vrot.slane %v260, 4
    %v264 = vadd.f32 %v260, %v263
    %v265 = vrot.slane %v264, 2
    %v266 = vadd.f32 %v264, %v265
    %v267 = vrot.slane %v266, 1
    %v268 = vadd.f32 %v266, %v267
    %v269 = vmul.f32 %v268, %v78
    %v270 = vsub.f32 %v260, %v269
    %v271 = vmul.f32 %v270, %v270
    %v272 = vrot.slane %v271, 4
    %v273 = vadd.f32 %v271, %v272
    %v274 = vrot.slane %v273, 2
    %v275 = vadd.f32 %v273, %v274
    %v276 = vrot.slane %v275, 1
    %v277 = vadd.f32 %v275, %v276
    %v278 = vmul.f32 %v277, 0.14285715
    %v279 = vadd.f32 %v278, 1e-10
    %v280 = vrsqrt.pop %v279
    %v281 = vmul.f32 %v270, %v280
    %s282 = scalar_lea.vmem [#allocation8], 16
    %v283 = vld [vmem:[%s282] sm:$0xff]
    %v284 = vld [vmem:[%s282 + $0x8] sm:$0xf]
    %v285 = vlaneseq
    %v286 = vshrl.u32 %v285, 7
    %v287 = vsub.s32 1, %v286
    %v288 = vrot.slane %v283, %v287
    %v289 = vmul.f32 %v288, %v281
    %v290 = vlaneseq
    %v291 = vshrl.u32 %v290, 7
    %v292 = vsub.s32 2, %v291
    %v293 = vrot.slane %v283, %v292
    %v294 = vadd.f32 %v289, %v293
    %v295 = vxor.u32 %v294, 2147483648
    %v296 = vmul.f32 %v295, 1.442695
    %v297 = vpow.pop %v296
    %v298 = vadd.f32 %v297, 1.0
    %v299 = vrcp.pop %v298
    %v300 = vmul.f32 1.0, %v299
    %v301 = vlaneseq
    %v302 = vshrl.u32 %v301, 7
    %v303 = vsub.s32 0, %v302
    %v304 = vrot.slane %v283, %v303
    %v305 = vmul.f32 %v304, %v300
    %v306 = vlaneseq
    %v307 = vshrl.u32 %v306, 7
    %v308 = vsub.s32 3, %v307
    %v309 = vrot.slane %v283, %v308
    %v310 = vmul.f32 %v309, %v281
    %v311 = vadd.f32 %v305, %v310
    %v312 = vlaneseq
    %v313 = vshrl.u32 %v312, 7
    %v314 = vsub.s32 4, %v313
    %v315 = vrot.slane %v283, %v314
    %v316 = vadd.f32 %v311, %v315
    %v317 = vlaneseq
    %v318 = vshrl.u32 %v317, 7
    %v319 = vsub.s32 6, %v318
    %v320 = vrot.slane %v283, %v319
    %v321 = vmul.f32 %v320, %v281
    %v322 = vlaneseq
    %v323 = vshrl.u32 %v322, 7
    %v324 = vsub.s32 7, %v323
    %v325 = vrot.slane %v283, %v324
    %v326 = vadd.f32 %v321, %v325
    %v327 = vxor.u32 %v326, 2147483648
    %v328 = vmul.f32 %v327, 1.442695
    %v329 = vpow.pop %v328
    %v330 = vadd.f32 %v329, 1.0
    %v331 = vrcp.pop %v330
    %v332 = vmul.f32 1.0, %v331
    %v333 = vlaneseq
    %v334 = vshrl.u32 %v333, 7
    %v335 = vsub.s32 5, %v334
    %v336 = vrot.slane %v283, %v335
    %v337 = vmul.f32 %v336, %v332
    %v338 = vlaneseq
    %v339 = vshrl.u32 %v338, 7
    %v340 = vsub.s32 0, %v339
    %v341 = vrot.slane %v284, %v340
    %v342 = vmul.f32 %v341, %v281
    %v343 = vadd.f32 %v337, %v342
    %v344 = vlaneseq
    %v345 = vshrl.u32 %v344, 7
    %v346 = vsub.s32 1, %v345
    %v347 = vrot.slane %v284, %v346
    %v348 = vadd.f32 %v343, %v347
    %s349 = scalar_lea.vmem [#allocation5], 8
    %v350 = vld [vmem:[%s349] sm:$0xff]
    %v351 = vsub.f32 %v350, %v316
    %v352 = vmul.f32 %v351, %v348
    %v353 = vadd.f32 %v352, %v316
    %v354 = vlaneseq
    %v355 = vshrl.u32 %v354, 7
    %v356 = vsub.s32 2, %v355
    %v357 = vrot.slane %v284, %v356
    %v358 = vsub.f32 %v353, %v357
    %v359 = vlaneseq
    %v360 = vshrl.u32 %v359, 7
    %v361 = vsub.s32 3, %v360
    %v362 = vrot.slane %v284, %v361
    %v363 = vmul.f32 %v358, %v362
    %s364 = scalar_lea.vmem [#allocation10], 8
    %365 = vst [vmem:[%s364] sm:$0xff] %v363
    %v366 = vld [vmem:[#allocation7] sm:$0xff]
    %v367 = vld [vmem:[#allocation7 + $0x8] sm:$0xff]
    %v368 = vld [vmem:[#allocation7 + $0x10] sm:$0xff]
    %v369 = vld [vmem:[#allocation7 + $0x18] sm:$0xff]
    %v370 = vld [vmem:[#allocation7 + $0x20] sm:$0xff]
    %v371 = vld [vmem:[#allocation7 + $0x28] sm:$0xff]
    %v372 = vld [vmem:[#allocation7 + $0x30] sm:$0xff]
    %v373 = vld [vmem:[#allocation7 + $0x38] sm:$0xff]
    %v374 = vld [vmem:[#allocation7 + $0x40] sm:$0xff]
    %v375 = vld [vmem:[#allocation7 + $0x48] sm:$0xff]
    %v376 = vld [vmem:[#allocation7 + $0x50] sm:$0xff]
    %v377 = vld [vmem:[#allocation7 + $0x58] sm:$0xff]
    %v378 = vld [vmem:[#allocation7 + $0x60] sm:$0xff]
    %v379 = vld [vmem:[#allocation7 + $0x68] sm:$0xff]
    %v380 = vld [vmem:[#allocation7 + $0x70] sm:$0xff]
    %v381 = vld [vmem:[#allocation7 + $0x78] sm:$0xff]
    %382 = vmatprep.subr.mxu0 0.0
    %383 = vmatpush1.msra.mxu0 %v366
    %384 = vmatprep.subr.mxu0 0.0
    %385 = vmatpush1.msra.mxu0 %v367
    %386 = vmatprep.subr.mxu0 0.0
    %387 = vmatpush1.msra.mxu0 %v368
    %388 = vmatprep.subr.mxu0 0.0
    %389 = vmatpush1.msra.mxu0 %v369
    %390 = vmatprep.subr.mxu0 0.0
    %391 = vmatpush1.msra.mxu0 %v370
    %392 = vmatprep.subr.mxu0 0.0
    %393 = vmatpush1.msra.mxu0 %v371
    %394 = vmatprep.subr.mxu0 0.0
    %395 = vmatpush1.msra.mxu0 %v372
    %396 = vmatprep.subr.mxu0 0.0
    %397 = vmatpush1.msra.mxu0 %v373
    %398 = vmatprep.subr.mxu0 0.0
    %399 = vmatpush1.msra.mxu0 %v374
    %400 = vmatprep.subr.mxu0 0.0
    %401 = vmatpush1.msra.mxu0 %v375
    %402 = vmatprep.subr.mxu0 0.0
    %403 = vmatpush1.msra.mxu0 %v376
    %404 = vmatprep.subr.mxu0 0.0
    %405 = vmatpush1.msra.mxu0 %v377
    %406 = vmatprep.subr.mxu0 0.0
    %407 = vmatpush1.msra.mxu0 %v378
    %408 = vmatprep.subr.mxu0 0.0
    %409 = vmatpush1.msra.mxu0 %v379
    %410 = vmatprep.subr.mxu0 0.0
    %411 = vmatpush1.msra.mxu0 %v380
    %412 = vmatprep.subr.mxu0 0.0
    %413 = vmatpush1.msra.mxu0 %v381
    %414 = vmatprep.subr.mxu0 0.0
    %415 = vmatpush1.msra.mxu0 0.0
    %416 = vmatprep.subr.mxu0 0.0
    %417 = vmatpush1.msra.mxu0 0.0
    %418 = vmatprep.subr.mxu0 0.0
    %419 = vmatpush1.msra.mxu0 0.0
    %420 = vmatprep.subr.mxu0 0.0
    %421 = vmatpush1.msra.mxu0 0.0
    %422 = vmatprep.subr.mxu0 0.0
    %423 = vmatpush1.msra.mxu0 0.0
    %424 = vmatprep.subr.mxu0 0.0
    %425 = vmatpush1.msra.mxu0 0.0
    %426 = vmatprep.subr.mxu0 0.0
    %427 = vmatpush1.msra.mxu0 0.0
    %428 = vmatprep.subr.mxu0 0.0
    %429 = vmatpush1.msra.mxu0 0.0
    %430 = vmatprep.subr.mxu0 0.0
    %431 = vmatpush1.msra.mxu0 0.0
    %432 = vmatprep.subr.mxu0 0.0
    %433 = vmatpush1.msra.mxu0 0.0
    %434 = vmatprep.subr.mxu0 0.0
    %435 = vmatpush1.msra.mxu0 0.0
    %436 = vmatprep.subr.mxu0 0.0
    %437 = vmatpush1.msra.mxu0 0.0
    %438 = vmatprep.subr.mxu0 0.0
    %439 = vmatpush1.msra.mxu0 0.0
    %440 = vmatprep.subr.mxu0 0.0
    %441 = vmatpush1.msra.mxu0 0.0
    %442 = vmatprep.subr.mxu0 0.0
    %443 = vmatpush1.msra.mxu0 0.0
    %444 = vmatprep.subr.mxu0 0.0
    %445 = vmatpush1.msra.mxu0 0.0
    %446 = vmatprep.mubr.f32.mxu0 0.0
    %447 = vmatmul.mubr.f32.gmra.mrb[0].mxu0 %v353
    %v448 = vpop.f32.mrb[0].mxu0
    %v449 = vadd.f32 0.0, %v448
    %v450 = vpop.f32.mrb[0].mxu0
    %451 = vdwg.mxu0
    %v452 = vrot.slane %v449, 4
    %v453 = vadd.f32 %v449, %v452
    %v454 = vrot.slane %v453, 2
    %v455 = vadd.f32 %v453, %v454
    %v456 = vrot.slane %v455, 1
    %v457 = vadd.f32 %v455, %v456
    %v458 = vmul.f32 %v457, %v78
    %v459 = vsub.f32 %v449, %v458
    %v460 = vmul.f32 %v459, %v459
    %v461 = vrot.slane %v460, 4
    %v462 = vadd.f32 %v460, %v461
    %v463 = vrot.slane %v462, 2
    %v464 = vadd.f32 %v462, %v463
    %v465 = vrot.slane %v464, 1
    %v466 = vadd.f32 %v464, %v465
    %v467 = vmul.f32 %v466, 0.14285715
    %v468 = vadd.f32 %v467, 1e-10
    %v469 = vrsqrt.pop %v468
    %v470 = vmul.f32 %v459, %v469
    %v471 = vld [vmem:[#allocation8] sm:$0xff]
    %v472 = vld [vmem:[#allocation8 + $0x8] sm:$0xf]
    %v473 = vlaneseq
    %v474 = vshrl.u32 %v473, 7
    %v475 = vsub.s32 1, %v474
    %v476 = vrot.slane %v471, %v475
    %v477 = vmul.f32 %v476, %v470
    %v478 = vlaneseq
    %v479 = vshrl.u32 %v478, 7
    %v480 = vsub.s32 2, %v479
    %v481 = vrot.slane %v471, %v480
    %v482 = vadd.f32 %v477, %v481
    %v483 = vxor.u32 %v482, 2147483648
    %v484 = vmul.f32 %v483, 1.442695
    %v485 = vpow.pop %v484
    %v486 = vadd.f32 %v485, 1.0
    %v487 = vrcp.pop %v486
    %v488 = vmul.f32 1.0, %v487
    %v489 = vlaneseq
    %v490 = vshrl.u32 %v489, 7
    %v491 = vsub.s32 0, %v490
    %v492 = vrot.slane %v471, %v491
    %v493 = vmul.f32 %v492, %v488
    %v494 = vlaneseq
    %v495 = vshrl.u32 %v494, 7
    %v496 = vsub.s32 3, %v495
    %v497 = vrot.slane %v471, %v496
    %v498 = vmul.f32 %v497, %v470
    %v499 = vadd.f32 %v493, %v498
    %v500 = vlaneseq
    %v501 = vshrl.u32 %v500, 7
    %v502 = vsub.s32 4, %v501
    %v503 = vrot.slane %v471, %v502
    %v504 = vadd.f32 %v499, %v503
    %v505 = vlaneseq
    %v506 = vshrl.u32 %v505, 7
    %v507 = vsub.s32 6, %v506
    %v508 = vrot.slane %v471, %v507
    %v509 = vmul.f32 %v508, %v470
    %v510 = vlaneseq
    %v511 = vshrl.u32 %v510, 7
    %v512 = vsub.s32 7, %v511
    %v513 = vrot.slane %v471, %v512
    %v514 = vadd.f32 %v509, %v513
    %v515 = vxor.u32 %v514, 2147483648
    %v516 = vmul.f32 %v515, 1.442695
    %v517 = vpow.pop %v516
    %v518 = vadd.f32 %v517, 1.0
    %v519 = vrcp.pop %v518
    %v520 = vmul.f32 1.0, %v519
    %v521 = vlaneseq
    %v522 = vshrl.u32 %v521, 7
    %v523 = vsub.s32 5, %v522
    %v524 = vrot.slane %v471, %v523
    %v525 = vmul.f32 %v524, %v520
    %v526 = vlaneseq
    %v527 = vshrl.u32 %v526, 7
    %v528 = vsub.s32 0, %v527
    %v529 = vrot.slane %v472, %v528
    %v530 = vmul.f32 %v529, %v470
    %v531 = vadd.f32 %v525, %v530
    %v532 = vlaneseq
    %v533 = vshrl.u32 %v532, 7
    %v534 = vsub.s32 1, %v533
    %v535 = vrot.slane %v472, %v534
    %v536 = vadd.f32 %v531, %v535
    %v537 = vld [vmem:[#allocation5] sm:$0xff]
    %v538 = vsub.f32 %v537, %v504
    %v539 = vmul.f32 %v538, %v536
    %v540 = vadd.f32 %v539, %v504
    %v541 = vlaneseq
    %v542 = vshrl.u32 %v541, 7
    %v543 = vsub.s32 2, %v542
    %v544 = vrot.slane %v472, %v543
    %v545 = vsub.f32 %v540, %v544
    %v546 = vlaneseq
    %v547 = vshrl.u32 %v546, 7
    %v548 = vsub.s32 3, %v547
    %v549 = vrot.slane %v472, %v548
    %v550 = vmul.f32 %v545, %v549
    %551 = vst [vmem:[#allocation10] sm:$0xff] %v550
    // Predicated region
    $region34: #{fused_decoder_call.1} parent=1 // pred_check
      _
    $region35: #{fused_decoder_call.1} parent=1 // pred_check_branch
      %553 = sbr.rel (0) target = $region37
    $region36: #{fused_decoder_call.1} parent=1 // pred_region
      %s555 = ssub.s32 384, 384
      %556 = vsyncadd [#allocation4], %s555
      %s557 = sshll.u32 [#allocation10], 4
      %s558 = int_to_ptr.vmem [resolvable:$true] %s557
      %563 = dma.vmem_to_hbm [thread:$0]  %s558, 384, %s4, [#allocation4], 128, 128, 8
    $region37: #{fused_decoder_call.1} parent=1 // pred_fallthru
      _
    // Predicated region
    $region38: #{fused_decoder_call.1} parent=1 // pred_check
      _
    $region39: #{fused_decoder_call.1} parent=1 // pred_check_branch
      %565 = sbr.rel (0) target = $region41
    $region40: #{fused_decoder_call.1} parent=1 // pred_region
      %566 = dma.done [#allocation4], 384
    $region41: #{fused_decoder_call.1} parent=1 // pred_fallthru
      _
    %567 = vsyncpa [#allocation3], 1
    %568 = vsyncpa [#allocation6], 1
    %569 = vsyncpa [#allocation9], 1
    %570 = vsyncpa [#allocation4], 1

</llo_original>
